<compile_context>
chip_gen: v7x
topology: tpu7x:2x2x1
jax: 0.10.0
libtpu: 0.0.40
codegen_flags: <defaults>
</compile_context>

<pallas_src>
import functools

import jax
import jax.numpy as jnp
from jax.experimental import pallas as pl
from jax.experimental.pallas import tpu as pltpu

LANES = 128
# ~512 KiB per input block per pipeline buffer.
_BLOCK_BYTES = 512 * 1024


def _cdiv(a, b):
    return -(-a // b)


def _rmse_partial_kernel(y_ref, yh_ref, o_ref, acc_ref, *, n_valid, needs_mask):
    c = pl.program_id(0)            # "core" axis (parallel)
    i = pl.program_id(1)            # streaming axis (arbitrary / reduction)
    tpc = pl.num_programs(1)
    br, lanes = y_ref.shape
    blk_elems = br * lanes

    @pl.when(i == 0)
    def _():
        acc_ref[...] = jnp.zeros_like(acc_ref)

    d = y_ref[...].astype(jnp.float32) - yh_ref[...].astype(jnp.float32)
    sq = d * d

    if needs_mask:
        blk = c * tpc + i                      # logical (un-clamped) block id
        blk_start = blk * blk_elems

        @pl.when(blk_start + blk_elems > n_valid)
        def _():
            row_ids = jax.lax.broadcasted_iota(jnp.int32, (br, lanes), 0)
            lane_ids = jax.lax.broadcasted_iota(jnp.int32, (br, lanes), 1)
            gidx = blk_start + row_ids * lanes + lane_ids
            acc_ref[...] += jnp.where(gidx < n_valid, sq, 0.0)

        @pl.when(blk_start + blk_elems <= n_valid)
        def _():
            acc_ref[...] += sq
    else:
        acc_ref[...] += sq

    @pl.when(i == tpc - 1)
    def _():
        o_ref[0, 0] = jnp.sum(acc_ref[...])


def detection_loss(y, y_hat):
    """sqrt(mean((y - y_hat)^2)) computed with a Pallas TPU streaming kernel."""
    assert y.shape == y_hat.shape, "y and y_hat must have the same shape"
    n_valid = y.size
    assert n_valid > 0

    yf = jnp.ravel(y)
    yhf = jnp.ravel(y_hat)
    if not jnp.issubdtype(yf.dtype, jnp.floating):
        yf = yf.astype(jnp.float32)
    if not jnp.issubdtype(yhf.dtype, jnp.floating):
        yhf = yhf.astype(jnp.float32)

    rows = _cdiv(n_valid, LANES)
    pad = rows * LANES - n_valid
    if pad:
        # Only up to 127 trailing elements; the tail is masked in-kernel anyway.
        yf = jnp.pad(yf, (0, pad))
        yhf = jnp.pad(yhf, (0, pad))
    y2 = yf.reshape(rows, LANES)
    yh2 = yhf.reshape(rows, LANES)

    itemsize = max(y2.dtype.itemsize, yh2.dtype.itemsize)
    max_rows = _BLOCK_BYTES // (LANES * itemsize)   # 1024 f32 rows / 2048 bf16
    br = rows if rows <= max_rows else max_rows     # full dim or multiple of 8
    n_blocks = _cdiv(rows, br)
    n_cores = 2 if n_blocks >= 2 else 1             # v7x: split across 2 TCs
    tpc = _cdiv(n_blocks, n_cores)
    covered = n_cores * tpc * br * LANES
    needs_mask = covered != n_valid

    def in_map(c, i):
        # Clamp logical block ids past the end so the DMA stays in bounds;
        # those blocks are fully masked to 0 inside the kernel.
        return (jnp.minimum(c * tpc + i, n_blocks - 1), 0)

    kernel = functools.partial(_rmse_partial_kernel, n_valid=n_valid,
                               needs_mask=needs_mask)

    partials = pl.pallas_call(
        kernel,
        out_shape=jax.ShapeDtypeStruct((n_cores, 1), jnp.float32),
        grid_spec=pltpu.PrefetchScalarGridSpec(
            num_scalar_prefetch=0,
            grid=(n_cores, tpc),
            in_specs=[
                pl.BlockSpec((br, LANES), in_map),
                pl.BlockSpec((br, LANES), in_map),
            ],
            out_specs=pl.BlockSpec((1, 1), lambda c, i: (c, 0),
                                   memory_space=pltpu.SMEM),
            scratch_shapes=[pltpu.VMEM((br, LANES), jnp.float32)],
        ),
        compiler_params=pltpu.CompilerParams(
            dimension_semantics=("parallel", "arbitrary"),
        ),
    )(y2, yh2)

    return jnp.sqrt(jnp.sum(partials) / jnp.float32(n_valid))


if __name__ == "__main__":
    key = jax.random.PRNGKey(0)
    k1, k2 = jax.random.split(key)

    # Primary demo: detection-head-shaped NCHW tensors [2, 4, 16, 16].
    y = jax.random.normal(k1, (2, 4, 16, 16), dtype=jnp.float32)
    y_hat = jax.random.normal(k2, (2, 4, 16, 16), dtype=jnp.float32)
    loss = jax.block_until_ready(detection_loss(y, y_hat))
    ref = jnp.sqrt(jnp.mean((y - y_hat) ** 2))
    assert jnp.allclose(loss, ref, rtol=1e-5, atol=1e-6), (loss, ref)

    # Extra self-checks: ragged tail (in-kernel masking) and the
    # multi-block / two-partial-sum (v7x split) path.
    for idx, shape in enumerate([(2, 4, 17, 19), (2, 4, 192, 192)]):
        ka, kb = jax.random.split(jax.random.PRNGKey(idx + 1))
        a = jax.random.normal(ka, shape, dtype=jnp.float32)
        b = jax.random.normal(kb, shape, dtype=jnp.float32)
        got = jax.block_until_ready(detection_loss(a, b))
        want = jnp.sqrt(jnp.mean((a - b) ** 2))
        assert jnp.allclose(got, want, rtol=1e-4, atol=1e-6), (shape, got, want)

    print("KERNEL_OK")
</pallas_src>

<mosaic_0001>
module attributes {stable_mosaic.version = 11 : i64} {
  func.func @_rmse_partial_kernel(%arg0: i32, %arg1: i32, %arg2: memref<16x128xf32, #tpu.memory_space<vmem>>, %arg3: memref<16x128xf32, #tpu.memory_space<vmem>>, %arg4: memref<1x1xf32, #tpu.memory_space<smem>>, %arg5: memref<16x128xf32, #tpu.memory_space<vmem>>) attributes {dimension_semantics = [#tpu.dimension_semantics<parallel>, #tpu.dimension_semantics<arbitrary>], iteration_bounds = array<i64: 1, 1>, scalar_prefetch = 0 : i64, scratch_operands = 1 : i64, tpu.core_type = #tpu.core_type<tc>, window_params = [{transform_indices = @transform_0, window_bounds = array<i64: 16, 128>}, {transform_indices = @transform_1, window_bounds = array<i64: 16, 128>}, {transform_indices = @transform_2, window_bounds = array<i64: 1, 1>}]} {
    %c0_i32 = arith.constant 0 : i32
    %0 = arith.cmpi eq, %arg1, %c0_i32 : i32
    %1 = arith.extui %0 : i1 to i32
    %c0_i32_0 = arith.constant 0 : i32
    %2 = arith.cmpi ne, %1, %c0_i32_0 : i32
    scf.if %2 {
      %cst = arith.constant 0.000000e+00 : f32
      %13 = vector.broadcast %cst : f32 to vector<16x128xf32>
      %c0_10 = arith.constant 0 : index
      %c0_11 = arith.constant 0 : index
      %14 = vector.load %arg5[%c0_10, %c0_11] : memref<16x128xf32, #tpu.memory_space<vmem>>, vector<16x128xf32>
      tpu.vector_store %arg5[%c0_10, %c0_11], %13 {strides = array<i32>} : memref<16x128xf32, #tpu.memory_space<vmem>>, vector<16x128xf32>,
    } else {
    }
    %c0 = arith.constant 0 : index
    %c0_1 = arith.constant 0 : index
    %3 = vector.load %arg2[%c0, %c0_1] : memref<16x128xf32, #tpu.memory_space<vmem>>, vector<16x128xf32>
    %c0_2 = arith.constant 0 : index
    %c0_3 = arith.constant 0 : index
    %4 = vector.load %arg3[%c0_2, %c0_3] : memref<16x128xf32, #tpu.memory_space<vmem>>, vector<16x128xf32>
    %5 = arith.subf %3, %4 : vector<16x128xf32>
    %6 = arith.mulf %5, %5 : vector<16x128xf32>
    %c0_4 = arith.constant 0 : index
    %c0_5 = arith.constant 0 : index
    %7 = vector.load %arg5[%c0_4, %c0_5] : memref<16x128xf32, #tpu.memory_space<vmem>>, vector<16x128xf32>
    %8 = arith.addf %7, %6 : vector<16x128xf32>
    %c0_6 = arith.constant 0 : index
    %c0_7 = arith.constant 0 : index
    %9 = vector.load %arg5[%c0_6, %c0_7] : memref<16x128xf32, #tpu.memory_space<vmem>>, vector<16x128xf32>
    tpu.vector_store %arg5[%c0_6, %c0_7], %8 {strides = array<i32>} : memref<16x128xf32, #tpu.memory_space<vmem>>, vector<16x128xf32>,
    %c0_i32_8 = arith.constant 0 : i32
    %10 = arith.cmpi eq, %arg1, %c0_i32_8 : i32
    %11 = arith.extui %10 : i1 to i32
    %c0_i32_9 = arith.constant 0 : i32
    %12 = arith.cmpi ne, %11, %c0_i32_9 : i32
    scf.if %12 {
      %c0_10 = arith.constant 0 : index
      %c0_11 = arith.constant 0 : index
      %13 = vector.load %arg5[%c0_10, %c0_11] : memref<16x128xf32, #tpu.memory_space<vmem>>, vector<16x128xf32>
      %14 = vector.shape_cast %13 : vector<16x128xf32> to vector<1x16x128xf32>
      %cst = arith.constant dense<0.000000e+00> : vector<1xf32>
      %15 = vector.multi_reduction <add>, %14, %cst [1, 2] : vector<1x16x128xf32> to vector<1xf32>
      %16 = vector.shape_cast %15 : vector<1xf32> to vector<1x1x1xf32>
      %17 = vector.extract %16[0, 0, 0] : f32 from vector<1x1x1xf32>
      %c0_12 = arith.constant 0 : index
      %c0_13 = arith.constant 0 : index
      %18 = memref.load %arg4[%c0_12, %c0_13] : memref<1x1xf32, #tpu.memory_space<smem>>
      memref.store %17, %arg4[%c0_12, %c0_13] : memref<1x1xf32, #tpu.memory_space<smem>>
    } else {
    }
    return
  }
  func.func @transform_0(%arg0: i32, %arg1: i32) -> (i32, i32) {
    %c1_i32 = arith.constant 1 : i32
    %0 = arith.muli %arg0, %c1_i32 : i32
    %1 = arith.addi %0, %arg1 : i32
    %c0_i32 = arith.constant 0 : i32
    %2 = arith.minsi %1, %c0_i32 : i32
    %c0_i32_0 = arith.constant 0 : i32
    %c0_i32_1 = arith.constant 0 : i32
    return %2, %c0_i32_0 : i32, i32
  }
  func.func @transform_1(%arg0: i32, %arg1: i32) -> (i32, i32) {
    %c1_i32 = arith.constant 1 : i32
    %0 = arith.muli %arg0, %c1_i32 : i32
    %1 = arith.addi %0, %arg1 : i32
    %c0_i32 = arith.constant 0 : i32
    %2 = arith.minsi %1, %c0_i32 : i32
    %c0_i32_0 = arith.constant 0 : i32
    %c0_i32_1 = arith.constant 0 : i32
    return %2, %c0_i32_0 : i32, i32
  }
  func.func @transform_2(%arg0: i32, %arg1: i32) -> (i32, i32) {
    %c0_i32 = arith.constant 0 : i32
    %c0_i32_0 = arith.constant 0 : i32
    return %arg0, %c0_i32 : i32, i32
  }
}

</mosaic_0001>

<llo_original>
// kernel: tpu_custom_call.1
$region0: #{tpu_custom_call.1}
  #allocation0 [shape = 'u32[]', space=smem, size = 0x4, offset = 0x4, fixed_abs, tag = 'smem constant byte address 0x4 - core index']
  #allocation1 [shape = 'u32[144,128]{1,0:T(1,128)}', space=vmem, size = 0x12000, scoped, tag = 'internal scratch']
  #allocation2 [shape = 'f32[16,128]{1,0:T(8,128)}', space=vmem, size = 0x2000, scoped, tag = 'scratch operand']
  %s0 = inlined_call_operand.hbm [shape: f32[16,128], index: 0, kind: input, shape index: {}]
  %s1 = inlined_call_operand.hbm [shape: f32[16,128], index: 1, kind: input, shape index: {}]
  %s2 = inlined_call_operand.hbm [shape: f32[1,1], index: 2, kind: output, shape index: {}]
  %s3 = sld [smem:[#allocation0]]
  $region34: #{tpu_custom_call.1} parent=0
    _
  %s5 = ssub.s32 1, %s3
  %s6 = scalar_select 0, %s5, %s3
  $region1: #{tpu_custom_call.1} parent=0
    #allocation3 [shape = 'u8[8192]{0}', space=vmem, size = 0x2000, scoped, tag = 'input window, operand 0, single buffered']
    #allocation4 [shape = 's32[1]{0}', space=sflag, size = 0x4, scoped, tag = 'scoped memory for tpu_custom_call.1']
    #allocation5 [shape = 's32[1]{0}', space=sflag, size = 0x4, scoped, tag = 'scoped memory for tpu_custom_call.1']
    #allocation6 [shape = 'u8[8192]{0}', space=vmem, size = 0x2000, scoped, tag = 'input window, operand 1, single buffered']
    #allocation7 [shape = 's32[1]{0}', space=sflag, size = 0x4, scoped, tag = 'scoped memory for tpu_custom_call.1']
    #allocation8 [shape = 'u8[512]{0}', space=smem, size = 0x200, scoped, tag = 'output window, operand 0, single buffered']
    %7 = vsyncpa [#allocation4], 0
    %8 = vsyncpa [#allocation7], 0
    %9 = vsyncpa [#allocation5], 0
    // Predicated region
    $region2: #{tpu_custom_call.1} parent=1 // pred_check
      _
    $region3: #{tpu_custom_call.1} parent=1 // pred_check_branch
      %11 = sbr.rel (0) target = $region5
    $region4: #{tpu_custom_call.1} parent=1 // pred_region
      %s12 = sadd.s32 0, 0
      %p13 = scmp.lt.s32.totalorder %s12, 0
      %s14 = scalar_select %p13, %s12, 0
      %s15 = smul.u32 2, %s14
      %s17 = ssub.s32 256, 256
      %18 = vsyncadd [#allocation4], %s17
      %s19 = smul.addr %s15, 128
      %s20 = scalar_lea.hbm %s0, %s19
      %s21 = sshll.u32 [#allocation3], 4
      %s22 = int_to_ptr.vmem [resolvable:$true] %s21
      %27 = dma.hbm_to_vmem [thread:$0]  %s20, 256, %s22, [#allocation4], 128, 128, 8
    $region5: #{tpu_custom_call.1} parent=1 // pred_fallthru
      _
    // Predicated region
    $region6: #{tpu_custom_call.1} parent=1 // pred_check
      _
    $region7: #{tpu_custom_call.1} parent=1 // pred_check_branch
      %29 = sbr.rel (0) target = $region9
    $region8: #{tpu_custom_call.1} parent=1 // pred_region
      %s30 = sadd.s32 0, 0
      %p31 = scmp.lt.s32.totalorder %s30, 0
      %s32 = scalar_select %p31, %s30, 0
      %s33 = smul.u32 2, %s32
      %s35 = ssub.s32 256, 256
      %36 = vsyncadd [#allocation7], %s35
      %s37 = smul.addr %s33, 128
      %s38 = scalar_lea.hbm %s1, %s37
      %s39 = sshll.u32 [#allocation6], 4
      %s40 = int_to_ptr.vmem [resolvable:$true] %s39
      %45 = dma.hbm_to_vmem [thread:$0]  %s38, 256, %s40, [#allocation7], 128, 128, 8
    $region9: #{tpu_custom_call.1} parent=1 // pred_fallthru
      _
    // Predicated region
    $region10: #{tpu_custom_call.1} parent=1 // pred_check
      _
    $region11: #{tpu_custom_call.1} parent=1 // pred_check_branch
      %47 = sbr.rel (0) target = $region13
    $region12: #{tpu_custom_call.1} parent=1 // pred_region
      %48 = dma.done [#allocation4], 256
    $region13: #{tpu_custom_call.1} parent=1 // pred_fallthru
      _
    // Predicated region
    $region14: #{tpu_custom_call.1} parent=1 // pred_check
      _
    $region15: #{tpu_custom_call.1} parent=1 // pred_check_branch
      %50 = sbr.rel (0) target = $region17
    $region16: #{tpu_custom_call.1} parent=1 // pred_region
      %51 = dma.done [#allocation7], 256
    $region17: #{tpu_custom_call.1} parent=1 // pred_fallthru
      _
    %s52 = sadd.s32 0, 0
    %p53 = scmp.lt.s32.totalorder %s52, 0
    %s54 = scalar_select %p53, %s52, 0
    %s55 = smul.u32 2, %s54
    %s56 = sadd.s32 0, 0
    %p57 = scmp.lt.s32.totalorder %s56, 0
    %s58 = scalar_select %p57, %s56, 0
    %s59 = smul.u32 2, %s58
    %p60 = scmp.eq.s32.totalorder 0, 0
    // Predicated region
    $region18: #{tpu_custom_call.1} parent=1 // pred_check
      %p61 = pneg %p60
    $region19: #{tpu_custom_call.1} parent=1 // pred_check_branch
      %63 = sbr.rel (%p61) target = $region21
    $region20: #{tpu_custom_call.1} parent=1 // pred_region
      %64 = vst [vmem:[#allocation2] sm:$0xff] 0.0
      %65 = vst [vmem:[#allocation2 + $0x8] sm:$0xff] 0.0
    $region21: #{tpu_custom_call.1} parent=1 // pred_fallthru
      _
    %v66 = vld [vmem:[#allocation3] sm:$0xff]
    %v67 = vld [vmem:[#allocation3 + $0x8] sm:$0xff]
    %v68 = vld [vmem:[#allocation6] sm:$0xff]
    %v69 = vld [vmem:[#allocation6 + $0x8] sm:$0xff]
    %v70 = vsub.f32 %v66, %v68
    %v71 = vsub.f32 %v67, %v69
    %v72 = vmul.f32 %v70, %v70
    %v73 = vmul.f32 %v71, %v71
    %v74 = vld [vmem:[#allocation2] sm:$0xff]
    %v75 = vld [vmem:[#allocation2 + $0x8] sm:$0xff]
    %v76 = vadd.f32 %v74, %v72
    %v77 = vadd.f32 %v75, %v73
    %78 = vst [vmem:[#allocation2] sm:$0xff] %v76
    %79 = vst [vmem:[#allocation2 + $0x8] sm:$0xff] %v77
    // Predicated region
    $region22: #{tpu_custom_call.1} parent=1 // pred_check
      %p80 = pneg %p60
    $region23: #{tpu_custom_call.1} parent=1 // pred_check_branch
      %82 = sbr.rel (%p80) target = $region25
    $region24: #{tpu_custom_call.1} parent=1 // pred_region
      %v83 = vld [vmem:[#allocation2] sm:$0xff]
      %v84 = vld [vmem:[#allocation2 + $0x8] sm:$0xff]
      %v85 = vadd.f32 %v83, %v84
      %86 = vadd.xlane.f32.xlu0 %v85
      %v87 = vpop.xlane.xlu0 %86
      %v88 = vrot.slane %v87, 4
      %v89 = vadd.f32 %v87, %v88
      %v90 = vrot.slane %v89, 2
      %v91 = vadd.f32 %v89, %v90
      %v92 = vrot.slane %v91, 1
      %v93 = vadd.f32 %v91, %v92
      %s94 = vtos %v93
      %s95 = scalar_lea.smem [#allocation8], 0
      %96 = sst [smem:[%s95]] %s94
    $region25: #{tpu_custom_call.1} parent=1 // pred_fallthru
      _
    // Predicated region
    $region26: #{tpu_custom_call.1} parent=1 // pred_check
      _
    $region27: #{tpu_custom_call.1} parent=1 // pred_check_branch
      %98 = sbr.rel (0) target = $region29
    $region28: #{tpu_custom_call.1} parent=1 // pred_region
      %s100 = ssub.s32 16, 16
      %101 = vsyncadd [#allocation5], %s100
      %104 = dma.smem_to_hbm [#allocation8], 16, %s2, [#allocation5]
    $region29: #{tpu_custom_call.1} parent=1 // pred_fallthru
      _
    // Predicated region
    $region30: #{tpu_custom_call.1} parent=1 // pred_check
      _
    $region31: #{tpu_custom_call.1} parent=1 // pred_check_branch
      %106 = sbr.rel (0) target = $region33
    $region32: #{tpu_custom_call.1} parent=1 // pred_region
      %107 = dma.done [#allocation5], 16
    $region33: #{tpu_custom_call.1} parent=1 // pred_fallthru
      _
    %108 = sfence
    %109 = vsyncpa [#allocation4], 1
    %110 = vsyncpa [#allocation7], 1
    %111 = vsyncpa [#allocation5], 1

</llo_original>
